<compile_context>
chip_gen: v6e
topology: v6e:2x2x1
jax: 0.10.0
libtpu: 0.0.40
codegen_flags: <defaults>
</compile_context>

<pallas_src>
import jax
import jax.numpy as jnp
from jax.experimental import pallas as pl
from jax.experimental.pallas import tpu as pltpu


_LANE = 512            # lane-dense last dim (multiple of 128, >=512 per review)
_MAX_TILE_ROWS = 512   # 512x512 f32 tile = 1 MiB; 2 bufs x (in+out) = ~4 MiB VMEM


def _copy_kernel(src_ref, out_ref):
    # Pure pass-through of one lane-dense tile.
    out_ref[...] = src_ref[...]


def _materialize_copy(c0):
    """Materialize a fresh copy of c0 via a tiled, lane-dense Pallas copy."""
    n = c0.size
    flat = c0.reshape(-1)

    rows = pl.cdiv(n, _LANE)
    tile_rows = rows if rows <= _MAX_TILE_ROWS else _MAX_TILE_ROWS
    padded_rows = pl.cdiv(rows, tile_rows) * tile_rows
    padded_n = padded_rows * _LANE
    if padded_n != n:
        flat = jnp.pad(flat, (0, padded_n - n))
    x2d = flat.reshape(padded_rows, _LANE)

    grid = (padded_rows // tile_rows,)
    out2d = pl.pallas_call(
        _copy_kernel,
        out_shape=jax.ShapeDtypeStruct((padded_rows, _LANE), c0.dtype),
        grid=grid,
        in_specs=[pl.BlockSpec((tile_rows, _LANE), lambda i: (i, 0))],
        out_specs=pl.BlockSpec((tile_rows, _LANE), lambda i: (i, 0)),
        compiler_params=pltpu.CompilerParams(
            dimension_semantics=("parallel",),
            vmem_limit_bytes=16 * 1024 * 1024,
        ),
        cost_estimate=pl.CostEstimate(
            flops=0,
            transcendentals=0,
            bytes_accessed=2 * c0.size * c0.dtype.itemsize,
        ),
    )(x2d)
    return out2d.reshape(-1)[:n].reshape(c0.shape)


def activate_pathway_forward(container, x, materialize=False):
    """Pallas equivalent of ActivatePathway.forward.

    `x` is accepted (to mirror the PyTorch signature) but is unused, exactly
    like the reference module. By default container[0] is returned directly
    (zero-copy, the highest-value optimization). Pass materialize=True to run
    the tiled Pallas copy kernel and get a freshly materialized buffer.
    """
    del x  # forward ignores its input
    c0 = container[0]
    if not materialize:
        return c0
    return _materialize_copy(c0)


if __name__ == "__main__":
    key = jax.random.PRNGKey(0)
    k_x, k_c = jax.random.split(key)

    # Small, deterministic shapes consistent with a conv-style pathway (NCHW).
    x = jax.random.normal(k_x, (2, 4, 16, 16), dtype=jnp.float32)

    # "container" holds previously-computed pathway tensors; forward returns
    # the first one. Initialize it deterministically in-script.
    stored = jax.random.normal(k_c, (2, 4, 16, 16), dtype=jnp.float32)
    container = (stored,)

    # Fast path: direct pass-through (no kernel, no HBM traffic).
    out_fast = jax.block_until_ready(activate_pathway_forward(container, x))
    assert out_fast.shape == stored.shape and out_fast.dtype == stored.dtype
    assert bool(jnp.all(out_fast == stored))

    # Materializing path: tiled lane-dense Pallas copy kernel.
    out_copy = jax.block_until_ready(
        activate_pathway_forward(container, x, materialize=True)
    )
    assert out_copy.shape == stored.shape and out_copy.dtype == stored.dtype
    assert bool(jnp.all(out_copy == stored))

    print("KERNEL_OK")
</pallas_src>

<mosaic_0001>
module attributes {stable_mosaic.version = 11 : i64} {
  func.func @_copy_kernel(%arg0: i32, %arg1: memref<4x512xf32, #tpu.memory_space<vmem>>, %arg2: memref<4x512xf32, #tpu.memory_space<vmem>>) attributes {dimension_semantics = [#tpu.dimension_semantics<parallel>], iteration_bounds = array<i64: 1>, scalar_prefetch = 0 : i64, scratch_operands = 0 : i64, tpu.core_type = #tpu.core_type<tc>, window_params = [{transform_indices = @transform_0, window_bounds = array<i64: 4, 512>}, {transform_indices = @transform_1, window_bounds = array<i64: 4, 512>}]} {
    %c0 = arith.constant 0 : index
    %c0_0 = arith.constant 0 : index
    %0 = vector.load %arg1[%c0, %c0_0] : memref<4x512xf32, #tpu.memory_space<vmem>>, vector<4x512xf32>
    %c0_1 = arith.constant 0 : index
    %c0_2 = arith.constant 0 : index
    %1 = vector.load %arg2[%c0_1, %c0_2] : memref<4x512xf32, #tpu.memory_space<vmem>>, vector<4x512xf32>
    tpu.vector_store %arg2[%c0_1, %c0_2], %0 {strides = array<i32>} : memref<4x512xf32, #tpu.memory_space<vmem>>, vector<4x512xf32>,
    return
  }
  func.func @transform_0(%arg0: i32) -> (i32, i32) {
    %c0_i32 = arith.constant 0 : i32
    %c0_i32_0 = arith.constant 0 : i32
    return %arg0, %c0_i32 : i32, i32
  }
  func.func @transform_1(%arg0: i32) -> (i32, i32) {
    %c0_i32 = arith.constant 0 : i32
    %c0_i32_0 = arith.constant 0 : i32
    return %arg0, %c0_i32 : i32, i32
  }
}

</mosaic_0001>

<llo_original>
// kernel: tpu_custom_call.1
$region0: #{tpu_custom_call.1}
  #allocation0 [shape = 'u32[]', space=smem, size = 0x4, offset = 0x4, fixed_abs, tag = 'smem constant byte address 0x4 - core index']
  #allocation1 [shape = 'u32[144,128]{1,0:T(1,128)}', space=vmem, size = 0x12000, scoped, tag = 'internal scratch']
  %s0 = inlined_call_operand.hbm [shape: f32[4,512], index: 0, kind: input, shape index: {}]
  %s1 = inlined_call_operand.hbm [shape: f32[4,512], index: 1, kind: output, shape index: {}]
  %s2 = sld [smem:[#allocation0]]
  $region18: #{tpu_custom_call.1} parent=0
    _
  %s4 = ssub.s32 1, %s2
  %s5 = scalar_select 0, %s4, %s2
  $region1: #{tpu_custom_call.1} parent=0
    #allocation2 [shape = 'u8[8192]{0}', space=vmem, size = 0x2000, scoped, tag = 'input window, operand 0, single buffered']
    #allocation3 [shape = 's32[1]{0}', space=sflag, size = 0x4, scoped, tag = 'scoped memory for tpu_custom_call.1']
    #allocation4 [shape = 's32[1]{0}', space=sflag, size = 0x4, scoped, tag = 'scoped memory for tpu_custom_call.1']
    #allocation5 [shape = 'u8[8192]{0}', space=vmem, size = 0x2000, scoped, tag = 'output window, operand 0, single buffered']
    %6 = vsyncpa [#allocation3], 0
    %7 = vsyncpa [#allocation4], 0
    // Predicated region
    $region2: #{tpu_custom_call.1} parent=1 // pred_check
      _
    $region3: #{tpu_custom_call.1} parent=1 // pred_check_branch
      %9 = sbr.rel (0) target = $region5
    $region4: #{tpu_custom_call.1} parent=1 // pred_region
      %s11 = ssub.s32 256, 256
      %12 = vsyncadd [#allocation3], %s11
      %s14 = sshll.u32 [#allocation2], 4
      %s15 = int_to_ptr.vmem [resolvable:$true] %s14
      %17 = dma.hbm_to_vmem [thread:$0]  %s0, 256, %s15, [#allocation3]
    $region5: #{tpu_custom_call.1} parent=1 // pred_fallthru
      _
    // Predicated region
    $region6: #{tpu_custom_call.1} parent=1 // pred_check
      _
    $region7: #{tpu_custom_call.1} parent=1 // pred_check_branch
      %19 = sbr.rel (0) target = $region9
    $region8: #{tpu_custom_call.1} parent=1 // pred_region
      %20 = dma.done [#allocation3], 256
    $region9: #{tpu_custom_call.1} parent=1 // pred_fallthru
      _
    %v21 = vld [vmem:[#allocation2] sm:$0xff]
    %v22 = vld [vmem:[#allocation2 + $0x8] sm:$0xff]
    %23 = vst [vmem:[#allocation5] sm:$0xff] %v21
    %24 = vst [vmem:[#allocation5 + $0x8] sm:$0xff] %v22
    // Predicated region
    $region10: #{tpu_custom_call.1} parent=1 // pred_check
      _
    $region11: #{tpu_custom_call.1} parent=1 // pred_check_branch
      %26 = sbr.rel (0) target = $region13
    $region12: #{tpu_custom_call.1} parent=1 // pred_region
      %s28 = ssub.s32 256, 256
      %29 = vsyncadd [#allocation4], %s28
      %s31 = sshll.u32 [#allocation5], 4
      %s32 = int_to_ptr.vmem [resolvable:$true] %s31
      %34 = dma.vmem_to_hbm [thread:$0]  %s32, 256, %s1, [#allocation4]
    $region13: #{tpu_custom_call.1} parent=1 // pred_fallthru
      _
    // Predicated region
    $region14: #{tpu_custom_call.1} parent=1 // pred_check
      _
    $region15: #{tpu_custom_call.1} parent=1 // pred_check_branch
      %36 = sbr.rel (0) target = $region17
    $region16: #{tpu_custom_call.1} parent=1 // pred_region
      %37 = dma.done [#allocation4], 256
    $region17: #{tpu_custom_call.1} parent=1 // pred_fallthru
      _
    %38 = vsyncpa [#allocation3], 1
    %39 = vsyncpa [#allocation4], 1

</llo_original>
